<compile_context>
chip_gen: v7x
topology: tpu7x:2x2x1
jax: 0.10.0
libtpu: 0.0.40
codegen_flags: <defaults>
</compile_context>

<pallas_src>
import math
from functools import partial

import jax
import jax.numpy as jnp
from jax.experimental import pallas as pl
from jax.experimental.pallas import tpu as pltpu


# ----------------------------- VMEM budget ---------------------------------- #

def _default_vmem_limit():
    try:
        cap = pltpu.get_tpu_info().vmem_capacity_bytes
    except Exception:
        cap = 128 * 1024 * 1024
    # leave headroom for compiler-internal scratch; caps at 96 MiB on 128 MiB parts,
    # ~48 MiB on v7x's 64 MiB per-core VMEM.
    return int(min(cap * 3 // 4, 96 * 1024 * 1024))


_VMEM_LIMIT = _default_vmem_limit()


def _cparams(*dim_semantics):
    if dim_semantics:
        return pltpu.CompilerParams(dimension_semantics=dim_semantics,
                                    vmem_limit_bytes=_VMEM_LIMIT)
    return pltpu.CompilerParams(vmem_limit_bytes=_VMEM_LIMIT)


# ----------------------------- tiling helpers ------------------------------ #

def _pick_tile(dim, prefs):
    """Largest preferred tile that divides `dim`, else the full dim."""
    for t in prefs:
        if t <= dim and dim % t == 0:
            return t
    return dim


_M_PREFS = (512, 256, 128, 64, 32, 16, 8)        # GEMM row tiles
_LN_ROW_PREFS = (1024, 512, 256, 128, 64, 32, 16, 8)  # mem-bound row kernels
_N_PREFS = (256, 128)                            # lane tiles (256-wide MXU)


def _pick_k(K):
    """Full-K single-pass whenever it fits comfortably; split only for huge K."""
    if K <= 4096:
        return K
    for t in (2048, 1024, 512, 256, 128):
        if K % t == 0:
            return t
    return K


def _gelu(y):
    return y * 0.5 * (1.0 + jax.lax.erf(y * (1.0 / math.sqrt(2.0))))


# ----------------------------- linear (tiled matmul) ------------------------ #

def _linear_fullk_kernel(x_ref, w_ref, b_ref, o_ref, *, act):
    # x: (tm, K) bf16, w: (tn, K) bf16 (PyTorch layout) -> contract over K, no .T
    y = jax.lax.dot_general(
        x_ref[...], w_ref[...],
        dimension_numbers=(((1,), (1,)), ((), ())),
        preferred_element_type=jnp.float32)
    y = y + b_ref[...]
    if act == "gelu":
        y = _gelu(y)
    elif act == "tanh":
        y = jnp.tanh(y)
    o_ref[...] = y.astype(o_ref.dtype)


def _linear_ksplit_kernel(x_ref, w_ref, b_ref, o_ref, acc_ref, *, act):
    @pl.when(pl.program_id(2) == 0)
    def _():
        acc_ref[...] = jnp.zeros_like(acc_ref)

    acc_ref[...] += jax.lax.dot_general(
        x_ref[...], w_ref[...],
        dimension_numbers=(((1,), (1,)), ((), ())),
        preferred_element_type=jnp.float32)

    @pl.when(pl.program_id(2) == pl.num_programs(2) - 1)
    def _():
        y = acc_ref[...] + b_ref[...]
        if act == "gelu":
            y = _gelu(y)
        elif act == "tanh":
            y = jnp.tanh(y)
        o_ref[...] = y.astype(o_ref.dtype)


def linear_pallas(x, w, b=None, act="none", out_dtype=jnp.bfloat16):
    """x: (M, K), w: (N, K) (PyTorch nn.Linear layout), b: (N,) -> (M, N)."""
    M, K = x.shape
    N = w.shape[0]
    if b is None:
        b = jnp.zeros((N,), jnp.float32)
    b2 = b.reshape(1, N).astype(jnp.float32)

    tm = _pick_tile(M, _M_PREFS)
    tn = _pick_tile(N, _N_PREFS)
    tk = _pick_k(K)

    x = x.astype(jnp.bfloat16)
    w = w.astype(jnp.bfloat16)

    if tk == K:
        # single K pass: no accumulator scratch, no "arbitrary" grid axis
        return pl.pallas_call(
            partial(_linear_fullk_kernel, act=act),
            out_shape=jax.ShapeDtypeStruct((M, N), out_dtype),
            grid=(M // tm, N // tn),
            in_specs=[
                pl.BlockSpec((tm, K), lambda i, j: (i, 0)),
                pl.BlockSpec((tn, K), lambda i, j: (j, 0)),
                pl.BlockSpec((1, tn), lambda i, j: (0, j)),
            ],
            out_specs=pl.BlockSpec((tm, tn), lambda i, j: (i, j)),
            compiler_params=_cparams("parallel", "parallel"),
        )(x, w, b2)

    grid = (M // tm, N // tn, K // tk)
    return pl.pallas_call(
        partial(_linear_ksplit_kernel, act=act),
        out_shape=jax.ShapeDtypeStruct((M, N), out_dtype),
        grid=grid,
        in_specs=[
            pl.BlockSpec((tm, tk), lambda i, j, k: (i, k)),
            pl.BlockSpec((tn, tk), lambda i, j, k: (j, k)),
            pl.BlockSpec((1, tn), lambda i, j, k: (0, j)),
        ],
        out_specs=pl.BlockSpec((tm, tn), lambda i, j, k: (i, j)),
        scratch_shapes=[pltpu.VMEM((tm, tn), jnp.float32)],
        compiler_params=_cparams("parallel", "parallel", "arbitrary"),
    )(x, w, b2)


# ----------------------------- LayerNorm (opt. fused residual) -------------- #

def _layernorm_kernel(x_ref, g_ref, b_ref, o_ref, *, eps):
    x = x_ref[...].astype(jnp.float32)
    u = jnp.mean(x, axis=-1, keepdims=True)
    s = jnp.mean((x - u) ** 2, axis=-1, keepdims=True)
    xn = (x - u) * jax.lax.rsqrt(s + eps)
    o_ref[...] = (xn * g_ref[...] + b_ref[...]).astype(o_ref.dtype)


def _residual_layernorm_kernel(x_ref, r_ref, g_ref, b_ref, o_ref, *, eps):
    x = x_ref[...].astype(jnp.float32) + r_ref[...].astype(jnp.float32)
    u = jnp.mean(x, axis=-1, keepdims=True)
    s = jnp.mean((x - u) ** 2, axis=-1, keepdims=True)
    xn = (x - u) * jax.lax.rsqrt(s + eps)
    o_ref[...] = (xn * g_ref[...] + b_ref[...]).astype(o_ref.dtype)


def layernorm_pallas(x, gamma, beta, residual=None, eps=1e-12,
                     out_dtype=jnp.bfloat16):
    """BertLayerNorm(eps=1e-12); if `residual` is given computes LN(x + residual)."""
    M, H = x.shape
    tm = _pick_tile(M, _LN_ROW_PREFS)
    g2 = gamma.reshape(1, H).astype(jnp.float32)
    b2 = beta.reshape(1, H).astype(jnp.float32)

    if residual is None:
        kernel = partial(_layernorm_kernel, eps=eps)
        in_specs = [pl.BlockSpec((tm, H), lambda i: (i, 0)),
                    pl.BlockSpec((1, H), lambda i: (0, 0)),
                    pl.BlockSpec((1, H), lambda i: (0, 0))]
        args = (x, g2, b2)
    else:
        kernel = partial(_residual_layernorm_kernel, eps=eps)
        in_specs = [pl.BlockSpec((tm, H), lambda i: (i, 0)),
                    pl.BlockSpec((tm, H), lambda i: (i, 0)),
                    pl.BlockSpec((1, H), lambda i: (0, 0)),
                    pl.BlockSpec((1, H), lambda i: (0, 0))]
        args = (x, residual, g2, b2)

    return pl.pallas_call(
        kernel,
        out_shape=jax.ShapeDtypeStruct((M, H), out_dtype),
        grid=(M // tm,),
        in_specs=in_specs,
        out_specs=pl.BlockSpec((tm, H), lambda i: (i, 0)),
        compiler_params=_cparams("parallel"),
    )(*args)


# ----------------------------- attention (per batch, head loop) ------------- #

def _attention_kernel(qkv_ref, m_ref, o_ref, ctx_ref, *, num_heads, d_head, hidden):
    # qkv_ref: (1, S, 3H) bf16 (scale already folded into Q weights),
    # m_ref:   (1, 1, S) f32 additive mask, o_ref: (1, S, H), ctx_ref: (S, H) f32 scratch.
    mask = m_ref[0].astype(jnp.float32)                      # (1, S)
    # TODO(synk): for long sequences, tile K/V along S flash-style (online softmax)
    # instead of materializing the full (S, S) score block.
    # TODO(synk): with a head-major QKV layout the heads could become a grid axis
    # ((B, NH) grid) for megacore sharding when B is small.
    for h in range(num_heads):
        lo = h * d_head
        qh = qkv_ref[0, :, lo:lo + d_head]                               # (S, DH) bf16
        kh = qkv_ref[0, :, hidden + lo:hidden + lo + d_head]
        vh = qkv_ref[0, :, 2 * hidden + lo:2 * hidden + lo + d_head]
        scores = jax.lax.dot_general(                                    # (S, S) f32
            qh, kh, dimension_numbers=(((1,), (1,)), ((), ())),
            preferred_element_type=jnp.float32)
        scores = scores + mask                                           # broadcast rows
        scores = scores - jnp.max(scores, axis=-1, keepdims=True)
        p = jnp.exp(scores)
        p = p * pl.reciprocal(jnp.sum(p, axis=-1, keepdims=True), approx=True)
        ctx_ref[:, lo:lo + d_head] = jnp.dot(
            p.astype(jnp.bfloat16), vh, preferred_element_type=jnp.float32)
    # single lane-dense full-width store per batch block
    o_ref[0] = ctx_ref[...].astype(o_ref.dtype)


def attention_pallas(qkv, ext_mask, num_heads, hidden):
    """qkv: (B, S, 3H) fused, ext_mask: (B, 1, S) f32 additive -> (B, S, H) bf16."""
    B, S, threeH = qkv.shape
    H = hidden
    d_head = H // num_heads
    return pl.pallas_call(
        partial(_attention_kernel, num_heads=num_heads, d_head=d_head, hidden=H),
        out_shape=jax.ShapeDtypeStruct((B, S, H), jnp.bfloat16),
        grid=(B,),
        in_specs=[
            pl.BlockSpec((1, S, threeH), lambda b: (b, 0, 0)),
            pl.BlockSpec((1, 1, S), lambda b: (b, 0, 0)),
        ],
        out_specs=pl.BlockSpec((1, S, H), lambda b: (b, 0, 0)),
        scratch_shapes=[pltpu.VMEM((S, H), jnp.float32)],
        compiler_params=_cparams("parallel"),
    )(qkv.astype(jnp.bfloat16), ext_mask.astype(jnp.float32))


# ----------------------------- fused MLM transform (dense+GELU+LN) ---------- #

def _dense_gelu_ln_kernel(x_ref, w_ref, b_ref, g_ref, be_ref, o_ref, *, eps):
    y = jax.lax.dot_general(
        x_ref[...], w_ref[...],
        dimension_numbers=(((1,), (1,)), ((), ())),
        preferred_element_type=jnp.float32)
    y = y + b_ref[...]
    y = _gelu(y)
    u = jnp.mean(y, axis=-1, keepdims=True)
    s = jnp.mean((y - u) ** 2, axis=-1, keepdims=True)
    yn = (y - u) * jax.lax.rsqrt(s + eps)
    o_ref[...] = (yn * g_ref[...] + be_ref[...]).astype(o_ref.dtype)


def transform_ln_pallas(x, w, b, gamma, beta, eps=1e-12):
    """BertPredictionHeadTransform: dense(H,H) + gelu + LayerNorm, fused."""
    M, H = x.shape
    tm = _pick_tile(M, _M_PREFS)
    return pl.pallas_call(
        partial(_dense_gelu_ln_kernel, eps=eps),
        out_shape=jax.ShapeDtypeStruct((M, H), jnp.bfloat16),
        grid=(M // tm,),
        in_specs=[
            pl.BlockSpec((tm, H), lambda i: (i, 0)),
            pl.BlockSpec((H, H), lambda i: (0, 0)),
            pl.BlockSpec((1, H), lambda i: (0, 0)),
            pl.BlockSpec((1, H), lambda i: (0, 0)),
            pl.BlockSpec((1, H), lambda i: (0, 0)),
        ],
        out_specs=pl.BlockSpec((tm, H), lambda i: (i, 0)),
        compiler_params=_cparams("parallel"),
    )(x.astype(jnp.bfloat16), w.astype(jnp.bfloat16),
      b.reshape(1, H).astype(jnp.float32),
      gamma.reshape(1, H).astype(jnp.float32),
      beta.reshape(1, H).astype(jnp.float32))


# ----------------------------- fused pooler + NSP head ---------------------- #

def _pooler_nsp_kernel(x_ref, pw_ref, pb_ref, sw_ref, sb_ref, o_ref):
    pooled = jax.lax.dot_general(
        x_ref[...], pw_ref[...],
        dimension_numbers=(((1,), (1,)), ((), ())),
        preferred_element_type=jnp.float32)
    pooled = jnp.tanh(pooled + pb_ref[...])
    logits = jax.lax.dot_general(
        pooled.astype(jnp.bfloat16), sw_ref[...],
        dimension_numbers=(((1,), (1,)), ((), ())),
        preferred_element_type=jnp.float32)
    o_ref[...] = (logits + sb_ref[...]).astype(o_ref.dtype)


def pooler_nsp_pallas(first_tok, pool_w, pool_b, seq_w, seq_b):
    """BertPooler (dense+tanh on [CLS]) fused with SeqRelationship dense(H->2)."""
    B, H = first_tok.shape
    return pl.pallas_call(
        _pooler_nsp_kernel,
        out_shape=jax.ShapeDtypeStruct((B, 2), jnp.float32),
    )(first_tok.astype(jnp.bfloat16), pool_w.astype(jnp.bfloat16),
      pool_b.reshape(1, H).astype(jnp.float32),
      seq_w.astype(jnp.bfloat16), seq_b.reshape(1, 2).astype(jnp.float32))


# ----------------------------- parameters (deterministic) ------------------ #

def init_params(key, cfg):
    keys = iter(jax.random.split(key, 128))

    def nrm(shape):
        return 0.02 * jax.random.normal(next(keys), shape, jnp.float32)

    H, I, V = cfg["hidden"], cfg["intermediate"], cfg["vocab_size"]
    p = {
        "word_emb": nrm((V, H)),
        "pos_emb": nrm((cfg["max_pos"], H)),
        "tok_emb": nrm((cfg["type_vocab"], H)),
        "emb_ln_g": jnp.ones((H,), jnp.float32),
        "emb_ln_b": jnp.zeros((H,), jnp.float32),
        "layers": [],
        "pool_w": nrm((H, H)), "pool_b": jnp.zeros((H,), jnp.float32),
        # MaskedWordPredictions
        "tr_w": nrm((H, H)), "tr_b": jnp.zeros((H,), jnp.float32),
        "tr_ln_g": jnp.ones((H,), jnp.float32), "tr_ln_b": jnp.zeros((H,), jnp.float32),
        "dec_w": nrm((V, H)),                       # decoder: Linear(H, V, bias=False)
        "dec_bias": jnp.zeros((V,), jnp.float32),   # separate nn.Parameter bias (zeros)
        # SeqRelationship (NSP, out_features=2)
        "seq_w": nrm((2, H)), "seq_b": jnp.zeros((2,), jnp.float32),
    }
    for _ in range(cfg["layers"]):
        p["layers"].append(dict(
            # fused QKV projection: rows [Wq; Wk; Wv]
            qkv_w=nrm((3 * H, H)), qkv_b=jnp.zeros((3 * H,), jnp.float32),
            ao_w=nrm((H, H)), ao_b=jnp.zeros((H,), jnp.float32),
            ao_ln_g=jnp.ones((H,), jnp.float32), ao_ln_b=jnp.zeros((H,), jnp.float32),
            i_w=nrm((I, H)), i_b=jnp.zeros((I,), jnp.float32),
            o_w=nrm((H, I)), o_b=jnp.zeros((H,), jnp.float32),
            o_ln_g=jnp.ones((H,), jnp.float32), o_ln_b=jnp.zeros((H,), jnp.float32),
        ))
    return p


# ----------------------------- parameter prep ------------------------------- #

def _fold_q_scale(qkv_w, qkv_b, H, num_heads):
    """Fold 1/sqrt(d_head) into the Q rows of the fused QKV projection (bit-equivalent)."""
    scale = 1.0 / math.sqrt(H // num_heads)
    return (qkv_w.at[:H, :].multiply(scale), qkv_b.at[:H].multiply(scale))


def _pad_vocab(dec_w, dec_b, multiple=256):
    """Pad the decoder weight/bias along the vocab axis so the MLM GEMM can N-tile."""
    V = dec_w.shape[0]
    if V % multiple == 0 or V <= 128:
        return dec_w, dec_b, V
    Vp = ((V + multiple - 1) // multiple) * multiple
    return (jnp.pad(dec_w, ((0, Vp - V), (0, 0))),
            jnp.pad(dec_b, ((0, Vp - V),)), V)


# ----------------------------- model forward -------------------------------- #

def bert_for_masked_lm(params, input_ids, token_type_ids=None, attention_mask=None, *, cfg):
    B, S = input_ids.shape
    H, NH = cfg["hidden"], cfg["heads"]

    if attention_mask is None:
        attention_mask = jnp.ones((B, S), jnp.int32)
    if token_type_ids is None:
        token_type_ids = jnp.zeros((B, S), jnp.int32)

    # extended attention mask: (1 - mask) * -10000, shape (B, 1, S)
    ext_mask = ((1.0 - attention_mask.astype(jnp.float32)) * -10000.0).reshape(B, 1, S)

    # ---- BertEmbeddings (gathers are glue, LayerNorm in Pallas) ----
    words = jnp.take(params["word_emb"], input_ids, axis=0)                 # (B, S, H)
    pos = jnp.take(params["pos_emb"], jnp.arange(S), axis=0)[None, :, :]    # (1, S, H)
    toks = jnp.take(params["tok_emb"], token_type_ids, axis=0)              # (B, S, H)
    emb = (words + pos + toks).reshape(B * S, H)
    x = layernorm_pallas(emb, params["emb_ln_g"], params["emb_ln_b"])       # bf16
    # TODO(synk): dropout layers are identity here (inference semantics).

    # ---- BertEncoder ----
    for lp in params["layers"]:
        qkv_w, qkv_b = _fold_q_scale(lp["qkv_w"], lp["qkv_b"], H, NH)
        qkv = linear_pallas(x, qkv_w, qkv_b)                                # (B*S, 3H)
        # fused QKV block goes straight into attention; q/k/v sliced in-kernel at 0/H/2H
        ctx = attention_pallas(qkv.reshape(B, S, 3 * H), ext_mask, NH, H)
        ctx = ctx.reshape(B * S, H)

        attn_out = linear_pallas(ctx, lp["ao_w"], lp["ao_b"])
        x = layernorm_pallas(attn_out, lp["ao_ln_g"], lp["ao_ln_b"], residual=x)

        inter = linear_pallas(x, lp["i_w"], lp["i_b"], act="gelu")
        ffn_out = linear_pallas(inter, lp["o_w"], lp["o_b"])
        x = layernorm_pallas(ffn_out, lp["o_ln_g"], lp["o_ln_b"], residual=x)

    seq_out = x                                             # (B*S, H) bf16

    # ---- BertPooler + SeqRelationship fused (pooled output is internal) ----
    first_tok = seq_out.reshape(B, S, H)[:, 0, :]           # (B, H)
    seq_relationship_score = pooler_nsp_pallas(
        first_tok, params["pool_w"], params["pool_b"],
        params["seq_w"], params["seq_b"])

    # ---- MaskedWordPredictions: fused transform (dense+gelu+LN) -> decoder + bias ----
    t = transform_ln_pallas(seq_out, params["tr_w"], params["tr_b"],
                            params["tr_ln_g"], params["tr_ln_b"])
    # pad vocab to a tileable multiple of 256 for the decoder GEMM; slice padding off after.
    dec_w_p, dec_b_p, V = _pad_vocab(params["dec_w"], params["dec_bias"])
    # logits emitted in bf16 to halve HBM writeback of the (B*S, V) slab.
    # TODO(synk): for training, fuse the masked-LM log-softmax/loss into the decoder kernel
    #             so the full logits never hit HBM.
    # TODO(synk): PyTorch BertForMaskedLM typically ties dec_w to word_emb; kept independent
    #             to match the reference init here.  (v7x-only: dec_w could be fp8.)
    pred = linear_pallas(t, dec_w_p, dec_b_p, out_dtype=jnp.bfloat16)
    if pred.shape[1] != V:
        pred = pred[:, :V]
    prediction_scores = pred.reshape(B, S, V)

    return prediction_scores, seq_relationship_score


# ----------------------------- main ----------------------------------------- #

if __name__ == "__main__":
    cfg = dict(vocab_size=64, hidden=32, layers=2, heads=4, intermediate=64,
               max_pos=16, type_vocab=2)
    B, S = 2, 8

    key = jax.random.PRNGKey(0)
    pkey, ikey, tkey = jax.random.split(key, 3)
    params = init_params(pkey, cfg)

    input_ids = jax.random.randint(ikey, (B, S), 0, cfg["vocab_size"], dtype=jnp.int32)
    token_type_ids = jax.random.randint(tkey, (B, S), 0, cfg["type_vocab"], dtype=jnp.int32)
    attention_mask = jnp.ones((B, S), jnp.int32)

    prediction_scores, seq_relationship_score = bert_for_masked_lm(
        params, input_ids, token_type_ids, attention_mask, cfg=cfg)
    jax.block_until_ready((prediction_scores, seq_relationship_score))

    assert prediction_scores.shape == (B, S, cfg["vocab_size"])
    assert seq_relationship_score.shape == (B, 2)
    assert bool(jnp.all(jnp.isfinite(prediction_scores.astype(jnp.float32))))
    assert bool(jnp.all(jnp.isfinite(seq_relationship_score)))
    print("KERNEL_OK")
</pallas_src>

<mosaic_0001>
module attributes {stable_mosaic.version = 11 : i64} {
  func.func @_layernorm_kernel(%arg0: i32, %arg1: memref<16x32xf32, #tpu.memory_space<vmem>>, %arg2: memref<1x32xf32, #tpu.memory_space<vmem>>, %arg3: memref<1x32xf32, #tpu.memory_space<vmem>>, %arg4: memref<16x32xbf16, #tpu.memory_space<vmem>>) attributes {dimension_semantics = [#tpu.dimension_semantics<parallel>], iteration_bounds = array<i64: 1>, scalar_prefetch = 0 : i64, scratch_operands = 0 : i64, tpu.core_type = #tpu.core_type<tc>, window_params = [{transform_indices = @transform_0, window_bounds = array<i64: 16, 32>}, {pipeline_mode = #tpu.pipeline_mode<synchronous>, transform_indices = @transform_1, window_bounds = array<i64: 1, 32>}, {pipeline_mode = #tpu.pipeline_mode<synchronous>, transform_indices = @transform_2, window_bounds = array<i64: 1, 32>}, {transform_indices = @transform_3, window_bounds = array<i64: 16, 32>}]} {
    %c0 = arith.constant 0 : index
    %c0_0 = arith.constant 0 : index
    %0 = vector.load %arg1[%c0, %c0_0] : memref<16x32xf32, #tpu.memory_space<vmem>>, vector<16x32xf32>
    %cst = arith.constant dense<0.000000e+00> : vector<16xf32>
    %1 = vector.multi_reduction <add>, %0, %cst [1] : vector<16x32xf32> to vector<16xf32>
    %2 = vector.shape_cast %1 : vector<16xf32> to vector<16x1xf32>
    %cst_1 = arith.constant 3.200000e+01 : f32
    %3 = vector.broadcast %cst_1 : f32 to vector<16x1xf32>
    %4 = arith.divf %2, %3 : vector<16x1xf32>
    %5 = vector.broadcast %4 : vector<16x1xf32> to vector<16x32xf32>
    %6 = arith.subf %0, %5 : vector<16x32xf32>
    %7 = arith.mulf %6, %6 : vector<16x32xf32>
    %cst_2 = arith.constant dense<0.000000e+00> : vector<16xf32>
    %8 = vector.multi_reduction <add>, %7, %cst_2 [1] : vector<16x32xf32> to vector<16xf32>
    %9 = vector.shape_cast %8 : vector<16xf32> to vector<16x1xf32>
    %cst_3 = arith.constant 3.200000e+01 : f32
    %10 = vector.broadcast %cst_3 : f32 to vector<16x1xf32>
    %11 = arith.divf %9, %10 : vector<16x1xf32>
    %12 = vector.broadcast %4 : vector<16x1xf32> to vector<16x32xf32>
    %13 = arith.subf %0, %12 : vector<16x32xf32>
    %cst_4 = arith.constant 9.99999996E-13 : f32
    %14 = vector.broadcast %cst_4 : f32 to vector<16x1xf32>
    %15 = arith.addf %11, %14 : vector<16x1xf32>
    %16 = math.rsqrt %15 : vector<16x1xf32>
    %17 = vector.broadcast %16 : vector<16x1xf32> to vector<16x32xf32>
    %18 = arith.mulf %13, %17 : vector<16x32xf32>
    %c0_5 = arith.constant 0 : index
    %c0_6 = arith.constant 0 : index
    %19 = vector.load %arg2[%c0_5, %c0_6] : memref<1x32xf32, #tpu.memory_space<vmem>>, vector<1x32xf32>
    %20 = vector.broadcast %19 : vector<1x32xf32> to vector<16x32xf32>
    %21 = arith.mulf %18, %20 : vector<16x32xf32>
    %c0_7 = arith.constant 0 : index
    %c0_8 = arith.constant 0 : index
    %22 = vector.load %arg3[%c0_7, %c0_8] : memref<1x32xf32, #tpu.memory_space<vmem>>, vector<1x32xf32>
    %23 = vector.broadcast %22 : vector<1x32xf32> to vector<16x32xf32>
    %24 = arith.addf %21, %23 : vector<16x32xf32>
    %25 = arith.truncf %24 : vector<16x32xf32> to vector<16x32xbf16>
    %c0_9 = arith.constant 0 : index
    %c0_10 = arith.constant 0 : index
    %26 = vector.load %arg4[%c0_9, %c0_10] : memref<16x32xbf16, #tpu.memory_space<vmem>>, vector<16x32xbf16>
    tpu.vector_store %arg4[%c0_9, %c0_10], %25 {strides = array<i32>} : memref<16x32xbf16, #tpu.memory_space<vmem>>, vector<16x32xbf16>,
    return
  }
  func.func @transform_0(%arg0: i32) -> (i32, i32) {
    %c0_i32 = arith.constant 0 : i32
    %c0_i32_0 = arith.constant 0 : i32
    return %arg0, %c0_i32 : i32, i32
  }
  func.func @transform_1(%arg0: i32) -> (i32, i32) {
    %c0_i32 = arith.constant 0 : i32
    %c0_i32_0 = arith.constant 0 : i32
    %c0_i32_1 = arith.constant 0 : i32
    return %c0_i32, %c0_i32_0 : i32, i32
  }
  func.func @transform_2(%arg0: i32) -> (i32, i32) {
    %c0_i32 = arith.constant 0 : i32
    %c0_i32_0 = arith.constant 0 : i32
    %c0_i32_1 = arith.constant 0 : i32
    return %c0_i32, %c0_i32_0 : i32, i32
  }
  func.func @transform_3(%arg0: i32) -> (i32, i32) {
    %c0_i32 = arith.constant 0 : i32
    %c0_i32_0 = arith.constant 0 : i32
    return %arg0, %c0_i32 : i32, i32
  }
}

</mosaic_0001>

<llo_original>
// kernel: tpu_custom_call.1
$region0: #{tpu_custom_call.1}
  #allocation0 [shape = 'u32[]', space=smem, size = 0x4, offset = 0x4, fixed_abs, tag = 'smem constant byte address 0x4 - core index']
  #allocation1 [shape = 'u32[144,128]{1,0:T(1,128)}', space=vmem, size = 0x12000, scoped, tag = 'internal scratch']
  %s0 = inlined_call_operand.hbm [shape: f32[16,32], index: 0, kind: input, shape index: {}]
  %s1 = inlined_call_operand.hbm [shape: f32[1,32], index: 1, kind: input, shape index: {}]
  %s2 = inlined_call_operand.hbm [shape: f32[1,32], index: 2, kind: input, shape index: {}]
  %s3 = inlined_call_operand.hbm [shape: bf16[16,32], index: 3, kind: output, shape index: {}]
  %s4 = sld [smem:[#allocation0]]
  $region34: #{tpu_custom_call.1} parent=0
    _
  %s6 = ssub.s32 1, %s4
  %s7 = scalar_select 0, %s6, %s4
  $region1: #{tpu_custom_call.1} parent=0
    #allocation2 [shape = 'u8[8192]{0}', space=vmem, size = 0x2000, scoped, tag = 'input window, operand 0, single buffered']
    #allocation3 [shape = 's32[1]{0}', space=sflag, size = 0x4, scoped, tag = 'scoped memory for tpu_custom_call.1']
    #allocation4 [shape = 's32[1]{0}', space=sflag, size = 0x4, scoped, tag = 'scoped memory for tpu_custom_call.1']
    #allocation5 [shape = 'u8[512]{0}', space=vmem, size = 0x400, scoped, tag = 'input window, operand 1, single buffered']
    #allocation6 [shape = 's32[1]{0}', space=sflag, size = 0x4, scoped, tag = 'scoped memory for tpu_custom_call.1']
    #allocation7 [shape = 'u8[512]{0}', space=vmem, size = 0x400, scoped, tag = 'input window, operand 2, single buffered']
    #allocation8 [shape = 'u8[4096]{0}', space=vmem, size = 0x1000, scoped, tag = 'output window, operand 0, single buffered']
    %8 = vsyncpa [#allocation3], 0
    %9 = vsyncpa [#allocation6], 0
    %10 = vsyncpa [#allocation4], 0
    // Predicated region
    $region2: #{tpu_custom_call.1} parent=1 // pred_check
      _
    $region3: #{tpu_custom_call.1} parent=1 // pred_check_branch
      %12 = sbr.rel (0) target = $region5
    $region4: #{tpu_custom_call.1} parent=1 // pred_region
      %s14 = ssub.s32 256, 256
      %15 = vsyncadd [#allocation3], %s14
      %s16 = sshll.u32 [#allocation2], 4
      %s17 = int_to_ptr.vmem [resolvable:$true] %s16
      %22 = dma.hbm_to_vmem [thread:$0]  %s0, 256, %s17, [#allocation3], 128, 128, 8
    $region5: #{tpu_custom_call.1} parent=1 // pred_fallthru
      _
    // Predicated region
    $region6: #{tpu_custom_call.1} parent=1 // pred_check
      _
    $region7: #{tpu_custom_call.1} parent=1 // pred_check_branch
      %24 = sbr.rel (0) target = $region9
    $region8: #{tpu_custom_call.1} parent=1 // pred_region
      %s26 = ssub.s32 16, 16
      %27 = vsyncadd [#allocation6], %s26
      %s29 = sshll.u32 [#allocation5], 4
      %s30 = int_to_ptr.vmem [resolvable:$true] %s29
      %32 = dma.hbm_to_vmem [thread:$0]  %s1, 16, %s30, [#allocation6]
    $region9: #{tpu_custom_call.1} parent=1 // pred_fallthru
      _
    // Predicated region
    $region10: #{tpu_custom_call.1} parent=1 // pred_check
      _
    $region11: #{tpu_custom_call.1} parent=1 // pred_check_branch
      %34 = sbr.rel (0) target = $region13
    $region12: #{tpu_custom_call.1} parent=1 // pred_region
      %s36 = ssub.s32 16, 16
      %37 = vsyncadd [#allocation6], %s36
      %s39 = sshll.u32 [#allocation7], 4
      %s40 = int_to_ptr.vmem [resolvable:$true] %s39
      %42 = dma.hbm_to_vmem [thread:$0]  %s2, 16, %s40, [#allocation6]
    $region13: #{tpu_custom_call.1} parent=1 // pred_fallthru
      _
    // Predicated region
    $region14: #{tpu_custom_call.1} parent=1 // pred_check
      _
    $region15: #{tpu_custom_call.1} parent=1 // pred_check_branch
      %44 = sbr.rel (0) target = $region17
    $region16: #{tpu_custom_call.1} parent=1 // pred_region
      %45 = dma.done [#allocation3], 256
    $region17: #{tpu_custom_call.1} parent=1 // pred_fallthru
      _
    // Predicated region
    $region18: #{tpu_custom_call.1} parent=1 // pred_check
      _
    $region19: #{tpu_custom_call.1} parent=1 // pred_check_branch
      %47 = sbr.rel (0) target = $region21
    $region20: #{tpu_custom_call.1} parent=1 // pred_region
      %48 = dma.done [#allocation6], 16
    $region21: #{tpu_custom_call.1} parent=1 // pred_fallthru
      _
    // Predicated region
    $region22: #{tpu_custom_call.1} parent=1 // pred_check
      _
    $region23: #{tpu_custom_call.1} parent=1 // pred_check_branch
      %50 = sbr.rel (0) target = $region25
    $region24: #{tpu_custom_call.1} parent=1 // pred_region
      %51 = dma.done [#allocation6], 16
    $region25: #{tpu_custom_call.1} parent=1 // pred_fallthru
      _
    %v52 = vld [vmem:[#allocation2] sm:$0xff]
    %v53 = vld [vmem:[#allocation2 + $0x8] sm:$0xff]
    %vm54 = vcmask 261120
    %v55 = vsel %vm54, %v52, 0.0
    %56 = vadd.xlane.f32.xlu0 %v55
    %v57 = vpop.xlane.xlu0 %56
    %v58 = vsel %vm54, %v53, 0.0
    %59 = vadd.xlane.f32.xlu0 %v58
    %v60 = vpop.xlane.xlu0 %59
    %v61 = vrcp.pop 32.0
    %v62 = vmul.f32 %v57, %v61
    %v63 = vmul.f32 %v60, %v61
    %v64 = vsub.f32 %v52, %v62
    %v65 = vsub.f32 %v53, %v63
    %v66 = vmul.f32 %v64, %v64
    %v67 = vmul.f32 %v65, %v65
    %v68 = vsel %vm54, %v66, 0.0
    %69 = vadd.xlane.f32.xlu0 %v68
    %v70 = vpop.xlane.xlu0 %69
    %v71 = vsel %vm54, %v67, 0.0
    %72 = vadd.xlane.f32.xlu0 %v71
    %v73 = vpop.xlane.xlu0 %72
    %v74 = vmul.f32 %v70, %v61
    %v75 = vmul.f32 %v73, %v61
    %v76 = vadd.f32 %v74, 1e-12
    %v77 = vadd.f32 %v75, 1e-12
    %v78 = vrsqrt.pop %v76
    %v79 = vrsqrt.pop %v77
    %v80 = vmul.f32 %v64, %v78
    %v81 = vmul.f32 %v65, %v79
    %v82 = vld [vmem:[#allocation5] sm:$0x1]
    %v84 = vlaneseq
    %v85 = vshrl.u32 %v84, 7
    %v86 = vsub.s32 0, %v85
    %v87 = vrot.slane %v82, %v86
    %v89 = vmul.f32 %v80, %v87
    %v90 = vmul.f32 %v81, %v87
    %v91 = vld [vmem:[#allocation7] sm:$0x1]
    %v93 = vlaneseq
    %v94 = vshrl.u32 %v93, 7
    %v95 = vsub.s32 0, %v94
    %v96 = vrot.slane %v91, %v95
    %v98 = vadd.f32 %v89, %v96
    %v99 = vadd.f32 %v90, %v96
    %v100 = vpack.c.bf16 %v99, %v98
    %v102 = vunpack.c.l.b16 %v100
    %v103 = vunpack.c.h.b16 %v100
    %v104 = vpack.c.b16 %v102, %v102
    %v105 = vpack.c.b16 %v103, %v103
    %vm108 = vcmask 257024
    %109 = vst.msk [vmem:[#allocation8] sm:$0xf] %vm108, %v104
    %110 = vst.msk [vmem:[#allocation8 + $0x4] sm:$0xf] %vm108, %v105
    // Predicated region
    $region26: #{tpu_custom_call.1} parent=1 // pred_check
      _
    $region27: #{tpu_custom_call.1} parent=1 // pred_check_branch
      %112 = sbr.rel (0) target = $region29
    $region28: #{tpu_custom_call.1} parent=1 // pred_region
      %s114 = ssub.s32 128, 128
      %115 = vsyncadd [#allocation4], %s114
      %s116 = sshll.u32 [#allocation8], 4
      %s117 = int_to_ptr.vmem [resolvable:$true] %s116
      %122 = dma.vmem_to_hbm [thread:$0]  %s117, 128, %s3, [#allocation4], 64, 64, 4
    $region29: #{tpu_custom_call.1} parent=1 // pred_fallthru
      _
    // Predicated region
    $region30: #{tpu_custom_call.1} parent=1 // pred_check
      _
    $region31: #{tpu_custom_call.1} parent=1 // pred_check_branch
      %124 = sbr.rel (0) target = $region33
    $region32: #{tpu_custom_call.1} parent=1 // pred_region
      %125 = dma.done [#allocation4], 128
    $region33: #{tpu_custom_call.1} parent=1 // pred_fallthru
      _
    %126 = vsyncpa [#allocation3], 1
    %127 = vsyncpa [#allocation6], 1
    %128 = vsyncpa [#allocation4], 1

</llo_original>
